<compile_context>
chip_gen: v5e
topology: v5e:2x2
jax: 0.10.0
libtpu: 0.0.40
codegen_flags: <defaults>
</compile_context>

<pallas_src>
import jax
import jax.numpy as jnp
from jax.experimental import pallas as pl
from jax.experimental.pallas import tpu as pltpu


def _bilinear_attention_kernel(h_ref, v_ref, bias_ref, o_ref):
    # h_ref   : (TB, N, D) VMEM   hidden-state tile (native dtype)
    # v_ref   : (TB, D)    VMEM   precomputed target @ W^T (f32)
    # bias_ref: (1, 1)     SMEM   scalar bias
    # o_ref   : (TB, D)    VMEM   output tile
    h = h_ref[...]                      # native dtype; ops below promote to f32
    v = v_ref[...]                      # already f32 from the wrapper
    bias = bias_ref[0, 0]

    # score[b,n] = sum_d h[b,n,d] * v[b,d] + bias     (VPU mul + XLU lane reduce)
    scores = jnp.sum(h * v[:, None, :], axis=-1) + bias          # (TB, N) f32
    scores = jnp.tanh(scores)                                     # bounded in [-1, 1]

    # Softmax over N; tanh bounds the scores so max-subtraction is unnecessary.
    e = jnp.exp(scores)
    denom = jnp.sum(e, axis=-1, keepdims=True)                    # (TB, 1)
    p = e * pl.reciprocal(denom, approx=True)                     # (TB, N) f32

    # out[b,:] = sum_n p[b,n] * h[b,n,:] on the otherwise-idle MXU (batched
    # matmul, M=1) instead of a VPU broadcast-mul + XLU sublane reduce:
    # halves XLU work per h vreg and skips a (TB,N,D) f32 temporary.
    out = jnp.einsum(
        "bkn,bnd->bkd",
        p[:, None, :].astype(h.dtype),
        h,
        preferred_element_type=jnp.float32,
    )                                                              # (TB, 1, D)
    o_ref[...] = out[:, 0, :].astype(o_ref.dtype)


def _vmem_budget_and_limit():
    """Generation-aware VMEM sizing.

    Returns (budget_bytes for our pipelined working set, vmem_limit_bytes for the
    compiler).  v5e/v6e: 128 MiB physical -> 96 MiB limit; v7x: 64 MiB -> 48 MiB.
    """
    phys = 64 << 20  # conservative fallback: v7x per-TensorCore VMEM
    try:
        info = pltpu.get_tpu_info()
        phys = int(getattr(info, "vmem_capacity_bytes", phys)) or phys
    except Exception:
        pass
    limit = min(phys * 3 // 4, 96 << 20)   # scoped limit handed to the compiler
    budget = limit * 3 // 5                # leave headroom for compiler scratch
    return budget, limit


def _pick_batch_tile(B, N, D, h_itemsize, out_itemsize, budget_bytes, min_steps=4):
    """Largest batch tile (multiple of 8) whose double-buffered pipeline buffers
    PLUS in-kernel f32 temporaries fit the budget, capped so the grid keeps a few
    steps for pipelining / megacore sharding whenever B allows."""
    # Double-buffered h/v/out tiles + the (TB,N,D) f32 broadcast-product temp
    # (counted twice to cover the upcast/reduction copies).
    per_b = 2 * (N * D * h_itemsize + D * 4 + D * out_itemsize) + 2 * N * D * 4
    tb = max(1, budget_bytes // per_b)
    if B > 8:
        # Keep >= ~min_steps grid steps (and >= 2 tiles for v7x's two TCs).
        tb = min(tb, max(8, B // min_steps))
    if tb >= B:
        return B
    # NOTE: for extremely large N*D per batch element an N-tiled variant would be
    # needed; for typical attention-pool shapes tb >= 8 fits comfortably.
    return max(8, (tb // 8) * 8)


def bilinear_attention(hidden_states, target, weight, bias):
    """hidden_states: [B,N,D], target: [B,1,D], weight: [D,D], bias: [1,1] -> [B,D]"""
    B, N, D = hidden_states.shape

    # Hoisted dense projection: v[b,:] = target[b,0,:] @ W^T (one MXU matmul,
    # expressed as a transposed contraction so no weight transpose materializes).
    v = jnp.einsum(
        "bj,ij->bi", target[:, 0, :], weight, preferred_element_type=jnp.float32
    ).astype(jnp.float32)
    bias = jnp.asarray(bias, jnp.float32).reshape(1, 1)

    # Pad the embedding dim to a multiple of 128 so output stores stay lane-dense.
    Dp = ((D + 127) // 128) * 128
    h = hidden_states
    if Dp != D:
        h = jnp.pad(h, ((0, 0), (0, 0), (0, Dp - D)))
        v = jnp.pad(v, ((0, 0), (0, Dp - D)))

    budget, vmem_limit = _vmem_budget_and_limit()
    tb = _pick_batch_tile(B, N, Dp, h.dtype.itemsize, h.dtype.itemsize, budget)
    grid = (pl.cdiv(B, tb),)

    out = pl.pallas_call(
        _bilinear_attention_kernel,
        out_shape=jax.ShapeDtypeStruct((B, Dp), hidden_states.dtype),
        grid=grid,
        in_specs=[
            pl.BlockSpec((tb, N, Dp), lambda b: (b, 0, 0)),
            pl.BlockSpec((tb, Dp), lambda b: (b, 0)),
            pl.BlockSpec(memory_space=pltpu.MemorySpace.SMEM),
        ],
        out_specs=pl.BlockSpec((tb, Dp), lambda b: (b, 0)),
        compiler_params=pltpu.CompilerParams(
            dimension_semantics=("parallel",),
            vmem_limit_bytes=vmem_limit,
        ),
    )(h, v, bias)

    return out[:, :D] if Dp != D else out


def bilinear_attention_ref(hidden_states, target, weight, bias):
    # Pure-JAX reference mirroring the PyTorch forward.
    t = jnp.broadcast_to(target, hidden_states.shape)                       # [B,N,D]
    scores = jnp.einsum("bni,ij,bnj->bn", hidden_states, weight, t) + bias[0, 0]
    scores = jnp.tanh(scores)
    p = jax.nn.softmax(scores, axis=-1)
    return jnp.einsum("bi,bij->bj", p, hidden_states)


if __name__ == "__main__":
    # D = 128 keeps the output lane-dense; B = 32 gives a 4-step grid so the
    # pipeline and (on v7x) both TensorCores are exercised.
    B, N, D = 32, 8, 128
    key = jax.random.PRNGKey(0)
    k1, k2, k3, k4 = jax.random.split(key, 4)

    hidden = jax.random.normal(k1, (B, N, D), dtype=jnp.float32)
    target = jax.random.normal(k2, (B, 1, D), dtype=jnp.float32)

    # Deterministic nn.Bilinear-style init: U(-1/sqrt(in1), 1/sqrt(in1))
    bound = 1.0 / (D ** 0.5)
    weight = jax.random.uniform(k3, (D, D), minval=-bound, maxval=bound, dtype=jnp.float32)
    bias = jax.random.uniform(k4, (1, 1), minval=-bound, maxval=bound, dtype=jnp.float32)

    out = jax.block_until_ready(bilinear_attention(hidden, target, weight, bias))
    ref = bilinear_attention_ref(hidden, target, weight, bias)

    assert out.shape == (B, D)
    # Relaxed tolerance: pl.reciprocal(approx=True) changes bits vs exact division.
    assert jnp.allclose(out, ref, atol=2e-3, rtol=2e-3), "mismatch vs reference"

    print("KERNEL_OK")
</pallas_src>

<mosaic_0001>
module attributes {stable_mosaic.version = 11 : i64} {
  func.func @_bilinear_attention_kernel(%arg0: i32, %arg1: memref<8x8x128xf32, #tpu.memory_space<vmem>>, %arg2: memref<8x128xf32, #tpu.memory_space<vmem>>, %arg3: memref<1x1xf32, #tpu.memory_space<smem>>, %arg4: memref<8x128xf32, #tpu.memory_space<vmem>>) attributes {dimension_semantics = [#tpu.dimension_semantics<parallel>], iteration_bounds = array<i64: 4>, scalar_prefetch = 0 : i64, scratch_operands = 0 : i64, tpu.core_type = #tpu.core_type<tc>, window_params = [{transform_indices = @transform_0, window_bounds = array<i64: 8, 8, 128>}, {transform_indices = @transform_1, window_bounds = array<i64: 8, 128>}, {transform_indices = @transform_2, window_bounds = array<i64: 1, 1>}, {transform_indices = @transform_3, window_bounds = array<i64: 8, 128>}]} {
    %c0 = arith.constant 0 : index
    %c0_0 = arith.constant 0 : index
    %c0_1 = arith.constant 0 : index
    %0 = vector.load %arg1[%c0, %c0_0, %c0_1] : memref<8x8x128xf32, #tpu.memory_space<vmem>>, vector<8x8x128xf32>
    %c0_2 = arith.constant 0 : index
    %c0_3 = arith.constant 0 : index
    %1 = vector.load %arg2[%c0_2, %c0_3] : memref<8x128xf32, #tpu.memory_space<vmem>>, vector<8x128xf32>
    %c0_4 = arith.constant 0 : index
    %c0_5 = arith.constant 0 : index
    %2 = memref.load %arg3[%c0_4, %c0_5] : memref<1x1xf32, #tpu.memory_space<smem>>
    %3 = vector.shape_cast %1 : vector<8x128xf32> to vector<8x1x128xf32>
    %4 = vector.broadcast %3 : vector<8x1x128xf32> to vector<8x8x128xf32>
    %5 = arith.mulf %0, %4 : vector<8x8x128xf32>
    %cst = arith.constant dense<0.000000e+00> : vector<8x8xf32>
    %6 = vector.multi_reduction <add>, %5, %cst [2] : vector<8x8x128xf32> to vector<8x8xf32>
    %7 = vector.broadcast %2 : f32 to vector<8x8xf32>
    %8 = arith.addf %6, %7 : vector<8x8xf32>
    %9 = math.tanh %8 : vector<8x8xf32>
    %10 = math.exp %9 : vector<8x8xf32>
    %cst_6 = arith.constant dense<0.000000e+00> : vector<8xf32>
    %11 = vector.multi_reduction <add>, %10, %cst_6 [1] : vector<8x8xf32> to vector<8xf32>
    %12 = vector.shape_cast %11 : vector<8xf32> to vector<8x1xf32>
    %13 = tpu.reciprocal %12 {approx = true} : vector<8x1xf32> -> vector<8x1xf32>
    %14 = vector.broadcast %13 : vector<8x1xf32> to vector<8x8xf32>
    %15 = arith.mulf %10, %14 : vector<8x8xf32>
    %16 = vector.shape_cast %15 : vector<8x8xf32> to vector<8x1x8xf32>
    "tpu.trace_start"() <{level = 10 : i32, message = "bkn,bnd->bkd"}> : () -> ()
    %cst_7 = arith.constant dense<0.000000e+00> : vector<8x1x128xf32>
    %17 = tpu.matmul %16, %0, %cst_7 {dimension_numbers = #tpu.dot_dimension_numbers<[2], [1], [1], [2], [0, 0, 0, 1, 1, 2], [0], [0]>} : vector<8x1x8xf32>, vector<8x8x128xf32>, vector<8x1x128xf32> -> vector<8x1x128xf32>
    "tpu.trace_stop"() : () -> ()
    %18 = vector.shape_cast %17 : vector<8x1x128xf32> to vector<8x128xf32>
    %c0_8 = arith.constant 0 : index
    %c0_9 = arith.constant 0 : index
    %19 = vector.load %arg4[%c0_8, %c0_9] : memref<8x128xf32, #tpu.memory_space<vmem>>, vector<8x128xf32>
    tpu.vector_store %arg4[%c0_8, %c0_9], %18 {strides = array<i32>} : memref<8x128xf32, #tpu.memory_space<vmem>>, vector<8x128xf32>,
    return
  }
  func.func @transform_0(%arg0: i32) -> (i32, i32, i32) {
    %c0_i32 = arith.constant 0 : i32
    %c0_i32_0 = arith.constant 0 : i32
    %c0_i32_1 = arith.constant 0 : i32
    return %arg0, %c0_i32, %c0_i32_0 : i32, i32, i32
  }
  func.func @transform_1(%arg0: i32) -> (i32, i32) {
    %c0_i32 = arith.constant 0 : i32
    %c0_i32_0 = arith.constant 0 : i32
    return %arg0, %c0_i32 : i32, i32
  }
  func.func @transform_2(%arg0: i32) -> (i32, i32) {
    %c0_i32 = arith.constant 0 : i32
    %c0_i32_0 = arith.constant 0 : i32
    %c0_i32_1 = arith.constant 0 : i32
    return %c0_i32, %c0_i32_0 : i32, i32
  }
  func.func @transform_3(%arg0: i32) -> (i32, i32) {
    %c0_i32 = arith.constant 0 : i32
    %c0_i32_0 = arith.constant 0 : i32
    return %arg0, %c0_i32 : i32, i32
  }
}

</mosaic_0001>

<llo_original>
// kernel: tpu_custom_call.1
$region0: #{tpu_custom_call.1}
  #allocation0 [shape = 'u32[]', space=smem, size = 0x4, offset = 0x4, fixed_abs, tag = 'smem constant byte address 0x4 - core index']
  #allocation1 [shape = 'u32[72,128]{1,0:T(1,128)}', space=vmem, size = 0x9000, scoped, tag = 'internal scratch']
  #allocation2 [shape = 'f32[1,1]{1,0:T(1,128)S(6)}', space=smem, size = 0x200, scoped, tag = 'scoped memory for tpu_custom_call.1']
  %s0 = inlined_call_operand.hbm [shape: f32[32,8,128], index: 0, kind: input, shape index: {}]
  %s1 = inlined_call_operand.hbm [shape: f32[32,128], index: 1, kind: input, shape index: {}]
  %s2 = inlined_call_operand.<no memory space> [shape: f32[1,1], index: 2, kind: input, shape index: {}]
  %s3 = inlined_call_operand.hbm [shape: f32[32,128], index: 3, kind: output, shape index: {}]
  %s4 = sld [smem:[#allocation0]]
  $region53: #{tpu_custom_call.1} parent=0
    _
  %s6 = ssub.s32 1, %s4
  %s7 = scalar_select 0, %s6, %s4
  %8 = sst [smem:[#allocation2]] %s2
  $region1: #{tpu_custom_call.1} parent=0
    #allocation3 [shape = 'u8[65536]{0}', space=vmem, size = 0x10000, scoped, tag = 'input window, operand 0']
    #allocation4 [shape = 's32[2]{0}', space=sflag, size = 0x8, scoped, tag = 'scoped memory for tpu_custom_call.1']
    #allocation5 [shape = 's32[2]{0}', space=sflag, size = 0x8, scoped, tag = 'scoped memory for tpu_custom_call.1']
    #allocation6 [shape = 'u8[8192]{0}', space=vmem, size = 0x2000, scoped, tag = 'input window, operand 1']
    #allocation7 [shape = 's32[2]{0}', space=sflag, size = 0x8, scoped, tag = 'scoped memory for tpu_custom_call.1']
    #allocation8 [shape = 'u8[8192]{0}', space=vmem, size = 0x2000, scoped, tag = 'output window, operand 0']
    %9 = vsyncpa [#allocation4], 0
    %s10 = scalar_lea.sflag [#allocation4], 1
    %11 = vsyncpa %s10, 0
    %12 = vsyncpa [#allocation7], 0
    %s13 = scalar_lea.sflag [#allocation7], 1
    %14 = vsyncpa %s13, 0
    %15 = vsyncpa [#allocation5], 0
    %s16 = scalar_lea.sflag [#allocation5], 1
    %17 = vsyncpa %s16, 0
    loop: start=0, step=1, limit=6
    $region2: #{tpu_custom_call.1} parent=1 // loop_pre_header
      _
    $region3: #{tpu_custom_call.1} parent=1 // loop_header
      %s19 = sphi 0, %s23
      %p20 = scmp.ge.s32.totalorder %s19, 6
      %s29 = sphi 0, %s31
      %s32 = sphi 0, %s29
      %s33 = sphi 0, %s32
      %s49 = sphi 0, %s33
      %s55 = sphi 0, %s57
      %s58 = sphi 0, %s55
      %s59 = sphi 0, %s58
      %s75 = sphi 0, %s59
      %s79 = sphi 0, %s79
      %s81 = sphi 0, %s79
      %s82 = sphi 0, %s81
      %s96 = sphi 0, %s82
      %s102 = sphi 0, %s104
      %s105 = sphi 0, %s102
      %s106 = sphi 0, %s105
      %s122 = sphi 0, %s106
    $region4: #{tpu_custom_call.1} parent=1 // loop_header_branch
      %22 = sbr.rel (%p20) target = $region8
    $region5: #{tpu_custom_call.1} parent=1 // loop_body
      %s24 = ssub.s32 %s19, 1
      %s25 = ssub.s32 %s19, 2
      %s26 = sadd.s32 %s19, 1
      %s27 = ssub.s32 %s19, %s26
      %p28 = scmp.eq.s32.totalorder %s27, 0
      %s30 = sadd.s32 %s29, 1
      %s31 = scalar_select %p28, %s29, %s30
      %p34 = pneg %p28
      %p35 = scmp.eq.s32.totalorder %s19, 3
      %p36 = por %p34, %p35
      %p37 = scmp.ne.s32.totalorder %s29, %s32
      %p38 = scmp.eq.s32.totalorder %s19, 0
      %p39 = por %p37, %p38
      %p40 = scmp.ne.s32.totalorder %s29, %s32
      %p41 = scmp.eq.s32.totalorder %s24, 3
      %p42 = por %p40, %p41
      %p43 = scmp.ne.s32.totalorder %s32, %s33
      %p44 = scmp.eq.s32.totalorder %s24, 0
      %p45 = por %p43, %p44
      %p46 = scmp.ne.s32.totalorder %s32, %s33
      %p47 = scmp.eq.s32.totalorder %s25, 3
      %p48 = por %p46, %p47
      %p50 = scmp.ne.s32.totalorder %s33, %s49
      %p51 = scmp.eq.s32.totalorder %s25, 0
      %p52 = por %p50, %p51
      %s53 = ssub.s32 %s19, %s26
      %p54 = scmp.eq.s32.totalorder %s53, 0
      %s56 = sadd.s32 %s55, 1
      %s57 = scalar_select %p54, %s55, %s56
      %p60 = pneg %p54
      %p61 = scmp.eq.s32.totalorder %s19, 3
      %p62 = por %p60, %p61
      %p63 = scmp.ne.s32.totalorder %s55, %s58
      %p64 = scmp.eq.s32.totalorder %s19, 0
      %p65 = por %p63, %p64
      %p66 = scmp.ne.s32.totalorder %s55, %s58
      %p67 = scmp.eq.s32.totalorder %s24, 3
      %p68 = por %p66, %p67
      %p69 = scmp.ne.s32.totalorder %s58, %s59
      %p70 = scmp.eq.s32.totalorder %s24, 0
      %p71 = por %p69, %p70
      %p72 = scmp.ne.s32.totalorder %s58, %s59
      %p73 = scmp.eq.s32.totalorder %s25, 3
      %p74 = por %p72, %p73
      %p76 = scmp.ne.s32.totalorder %s59, %s75
      %p77 = scmp.eq.s32.totalorder %s25, 0
      %p78 = por %p76, %p77
      %s80 = sadd.s32 %s79, 1
      %p83 = scmp.eq.s32.totalorder %s19, 3
      %p84 = scmp.ne.s32.totalorder %s79, %s81
      %p85 = scmp.eq.s32.totalorder %s19, 0
      %p86 = por %p84, %p85
      %p87 = scmp.ne.s32.totalorder %s79, %s81
      %p88 = scmp.eq.s32.totalorder %s24, 3
      %p89 = por %p87, %p88
      %p90 = scmp.ne.s32.totalorder %s81, %s82
      %p91 = scmp.eq.s32.totalorder %s24, 0
      %p92 = por %p90, %p91
      %p93 = scmp.ne.s32.totalorder %s81, %s82
      %p94 = scmp.eq.s32.totalorder %s25, 3
      %p95 = por %p93, %p94
      %p97 = scmp.ne.s32.totalorder %s82, %s96
      %p98 = scmp.eq.s32.totalorder %s25, 0
      %p99 = por %p97, %p98
      %s100 = ssub.s32 %s19, %s26
      %p101 = scmp.eq.s32.totalorder %s100, 0
      %s103 = sadd.s32 %s102, 1
      %s104 = scalar_select %p101, %s102, %s103
      %p107 = pneg %p101
      %p108 = scmp.eq.s32.totalorder %s19, 3
      %p109 = por %p107, %p108
      %p110 = scmp.ne.s32.totalorder %s102, %s105
      %p111 = scmp.eq.s32.totalorder %s19, 0
      %p112 = por %p110, %p111
      %p113 = scmp.ne.s32.totalorder %s102, %s105
      %p114 = scmp.eq.s32.totalorder %s24, 3
      %p115 = por %p113, %p114
      %p116 = scmp.ne.s32.totalorder %s105, %s106
      %p117 = scmp.eq.s32.totalorder %s24, 0
      %p118 = por %p116, %p117
      %p119 = scmp.ne.s32.totalorder %s105, %s106
      %p120 = scmp.eq.s32.totalorder %s25, 3
      %p121 = por %p119, %p120
      %p123 = scmp.ne.s32.totalorder %s106, %s122
      %p124 = scmp.eq.s32.totalorder %s25, 0
      %p125 = por %p123, %p124
      %p126 = scmp.le.s32.totalorder 1, %s19
      %p127 = scmp.lt.s32.totalorder %s19, 5
      %p128 = pnand %p126, %p127
      %p129 = pneg %p128
      // Predicated region
      $region9: #{tpu_custom_call.1} parent=5 // pred_check
        _
      $region10: #{tpu_custom_call.1} parent=5 // pred_check_branch
        %131 = sbr.rel (%p128) target = $region12
      $region11: #{tpu_custom_call.1} parent=5 // pred_region
        %s132 = ssub.s32 %s19, 1
        // Predicated region
        $region13: #{tpu_custom_call.1} parent=11 // pred_check
          %p133 = pneg %p92
        $region14: #{tpu_custom_call.1} parent=11 // pred_check_branch
          %135 = sbr.rel (%p133) target = $region16
        $region15: #{tpu_custom_call.1} parent=11 // pred_region
          _
        $region16: #{tpu_custom_call.1} parent=11 // pred_fallthru
          _
      $region12: #{tpu_custom_call.1} parent=5 // pred_fallthru
        _
      %p136 = scmp.lt.s32.totalorder %s19, 4
      // Predicated region
      $region17: #{tpu_custom_call.1} parent=5 // pred_check
        %p137 = pneg %p136
      $region18: #{tpu_custom_call.1} parent=5 // pred_check_branch
        %139 = sbr.rel (%p137) target = $region20
      $region19: #{tpu_custom_call.1} parent=5 // pred_region
        // Predicated region
        $region21: #{tpu_custom_call.1} parent=19 // pred_check
          %p140 = pneg %p39
        $region22: #{tpu_custom_call.1} parent=19 // pred_check_branch
          %142 = sbr.rel (%p140) target = $region24
        $region23: #{tpu_custom_call.1} parent=19 // pred_region
          %s143 = sand.u32 %s29, 1
          %s144 = scalar_lea.sflag [#allocation4], %s143
          %s145 = sand.u32 %s29, 1
          %s146 = smul.addr %s145, 64
          %s147 = scalar_lea.vmem [#allocation3], %s146
          %s148 = smul.u32 8, %s19
          %150 = vsyncadd %s144, 0
          %s151 = smul.addr %s148, 8
          %s152 = scalar_lea.hbm %s0, %s151
          %s153 = sshll.u32 %s152, 4
          %s154 = int_to_ptr.hbm [resolvable:$true] %s153
          %s155 = sshll.u32 %s147, 4
          %s156 = int_to_ptr.vmem [resolvable:$true] %s155
          %161 = dma.hbm_to_vmem [thread:$0]  %s154, 1024, %s156, %s144, 128, 128, 8
        $region24: #{tpu_custom_call.1} parent=19 // pred_fallthru
          _
        // Predicated region
        $region25: #{tpu_custom_call.1} parent=19 // pred_check
          %p162 = pneg %p65
        $region26: #{tpu_custom_call.1} parent=19 // pred_check_branch
          %164 = sbr.rel (%p162) target = $region28
        $region27: #{tpu_custom_call.1} parent=19 // pred_region
          %s165 = sand.u32 %s55, 1
          %s166 = scalar_lea.sflag [#allocation7], %s165
          %s167 = sand.u32 %s55, 1
          %s168 = smul.addr %s167, 8
          %s169 = scalar_lea.vmem [#allocation6], %s168
          %171 = vsyncadd %s166, 0
          %s172 = smul.addr %s19, 8
          %s173 = scalar_lea.hbm %s1, %s172
          %s175 = sshll.u32 %s173, 4
          %s176 = int_to_ptr.hbm [resolvable:$true] %s175
          %s177 = sshll.u32 %s169, 4
          %s178 = int_to_ptr.vmem [resolvable:$true] %s177
          %180 = dma.hbm_to_vmem [thread:$0]  %s176, 128, %s178, %s166
        $region28: #{tpu_custom_call.1} parent=19 // pred_fallthru
          _
      $region20: #{tpu_custom_call.1} parent=5 // pred_fallthru
        _
      %p181 = scmp.le.s32.totalorder 1, %s19
      %p182 = scmp.lt.s32.totalorder %s19, 5
      %p183 = pnand %p181, %p182
      %p184 = pneg %p183
      // Predicated region
      $region29: #{tpu_custom_call.1} parent=5 // pred_check
        _
      $region30: #{tpu_custom_call.1} parent=5 // pred_check_branch
        %186 = sbr.rel (%p183) target = $region32
      $region31: #{tpu_custom_call.1} parent=5 // pred_region
        %s187 = ssub.s32 %s19, 1
        %s188 = sand.u32 %s32, 1
        %s189 = scalar_lea.sflag [#allocation4], %s188
        %s190 = sand.u32 %s32, 1
        %s191 = smul.addr %s190, 64
        %s192 = scalar_lea.vmem [#allocation3], %s191
        // Predicated region
        $region33: #{tpu_custom_call.1} parent=31 // pred_check
          %p193 = pneg %p45
        $region34: #{tpu_custom_call.1} parent=31 // pred_check_branch
          %195 = sbr.rel (%p193) target = $region36
        $region35: #{tpu_custom_call.1} parent=31 // pred_region
          %197 = dma.done %s189, 1024
        $region36: #{tpu_custom_call.1} parent=31 // pred_fallthru
          _
        %s198 = sand.u32 %s58, 1
        %s199 = scalar_lea.sflag [#allocation7], %s198
        %s200 = sand.u32 %s58, 1
        %s201 = smul.addr %s200, 8
        %s202 = scalar_lea.vmem [#allocation6], %s201
        // Predicated region
        $region37: #{tpu_custom_call.1} parent=31 // pred_check
          %p203 = pneg %p71
        $region38: #{tpu_custom_call.1} parent=31 // pred_check_branch
          %205 = sbr.rel (%p203) target = $region40
        $region39: #{tpu_custom_call.1} parent=31 // pred_region
          %207 = dma.done %s199, 128
        $region40: #{tpu_custom_call.1} parent=31 // pred_fallthru
          _
        %s208 = sand.u32 %s32, 1
        %s209 = scalar_lea.sflag [#allocation4], %s208
        %s210 = sand.u32 %s32, 1
        %s211 = smul.addr %s210, 64
        %s212 = scalar_lea.vmem [#allocation3], %s211
        %p213 = pneg %p45
        %p214 = pneg %p42
        %s215 = sand.u32 %s58, 1
        %s216 = scalar_lea.sflag [#allocation7], %s215
        %s217 = sand.u32 %s58, 1
        %s218 = smul.addr %s217, 8
        %s219 = scalar_lea.vmem [#allocation6], %s218
        %p220 = pneg %p71
        %p221 = pneg %p68
        %p222 = pneg %p92
        %p223 = pneg %p89
        %p224 = pneg %p118
        %p225 = pneg %p115
        %s226 = sand.u32 %s105, 1
        %s227 = scalar_lea.sflag [#allocation5], %s226
        %s228 = sand.u32 %s105, 1
        %s229 = smul.addr %s228, 8
        %s230 = scalar_lea.vmem [#allocation8], %s229
        %s231 = smul.u32 8, %s24
        %v232 = vld [vmem:[%s192] sm:$0xff]
        %v233 = vld [vmem:[%s192 + $0x8] sm:$0xff]
        %v234 = vld [vmem:[%s192 + $0x10] sm:$0xff]
        %v235 = vld [vmem:[%s192 + $0x18] sm:$0xff]
        %v236 = vld [vmem:[%s192 + $0x20] sm:$0xff]
        %v237 = vld [vmem:[%s192 + $0x28] sm:$0xff]
        %v238 = vld [vmem:[%s192 + $0x30] sm:$0xff]
        %v239 = vld [vmem:[%s192 + $0x38] sm:$0xff]
        %v240 = vld [vmem:[%s202] sm:$0xff]
        %s241 = sld [smem:[#allocation2]]
        %v243 = vrot.slane %v240, 1
        %v244 = vrot.slane %v240, 2
        %v245 = vrot.slane %v240, 3
        %v246 = vrot.slane %v240, 4
        %v247 = vrot.slane %v240, 5
        %v248 = vrot.slane %v240, 6
        %v249 = vrot.slane %v240, 7
        %v250 = vperm.slane %v240, 0
        %v251 = vperm.slane %v243, 0
        %v252 = vperm.slane %v244, 0
        %v253 = vperm.slane %v245, 0
        %v254 = vperm.slane %v246, 0
        %v255 = vperm.slane %v247, 0
        %v256 = vperm.slane %v248, 0
        %v257 = vperm.slane %v249, 0
        %v266 = vmul.f32 %v232, %v250
        %v267 = vmul.f32 %v233, %v251
        %v268 = vmul.f32 %v234, %v252
        %v269 = vmul.f32 %v235, %v253
        %v270 = vmul.f32 %v236, %v254
        %v271 = vmul.f32 %v237, %v255
        %v272 = vmul.f32 %v238, %v256
        %v273 = vmul.f32 %v239, %v257
        %274 = vadd.xlane.f32.xlu0 %v266
        %v275 = vpop.xlane.xlu0 %274
        %276 = vadd.xlane.f32.xlu0 %v267
        %v277 = vpop.xlane.xlu0 %276
        %278 = vadd.xlane.f32.xlu0 %v268
        %v279 = vpop.xlane.xlu0 %278
        %280 = vadd.xlane.f32.xlu0 %v269
        %v281 = vpop.xlane.xlu0 %280
        %282 = vadd.xlane.f32.xlu0 %v270
        %v283 = vpop.xlane.xlu0 %282
        %284 = vadd.xlane.f32.xlu0 %v271
        %v285 = vpop.xlane.xlu0 %284
        %286 = vadd.xlane.f32.xlu0 %v272
        %v287 = vpop.xlane.xlu0 %286
        %288 = vadd.xlane.f32.xlu0 %v273
        %v289 = vpop.xlane.xlu0 %288
        %v290 = vstv %s241
        %v291 = vadd.f32 %v275, %v290
        %v292 = vadd.f32 %v277, %v290
        %v293 = vadd.f32 %v279, %v290
        %v294 = vadd.f32 %v281, %v290
        %v295 = vadd.f32 %v283, %v290
        %v296 = vadd.f32 %v285, %v290
        %v297 = vadd.f32 %v287, %v290
        %v298 = vadd.f32 %v289, %v290
        %v299 = vtanh.pop %v291
        %v300 = vtanh.pop %v292
        %v301 = vtanh.pop %v293
        %v302 = vtanh.pop %v294
        %v303 = vtanh.pop %v295
        %v304 = vtanh.pop %v296
        %v305 = vtanh.pop %v297
        %v306 = vtanh.pop %v298
        %v307 = vmul.f32 %v299, 1.442695
        %v308 = vpow.pop %v307
        %v309 = vmul.f32 %v300, 1.442695
        %v310 = vpow.pop %v309
        %v311 = vmul.f32 %v301, 1.442695
        %v312 = vpow.pop %v311
        %v313 = vmul.f32 %v302, 1.442695
        %v314 = vpow.pop %v313
        %v315 = vmul.f32 %v303, 1.442695
        %v316 = vpow.pop %v315
        %v317 = vmul.f32 %v304, 1.442695
        %v318 = vpow.pop %v317
        %v319 = vmul.f32 %v305, 1.442695
        %v320 = vpow.pop %v319
        %v321 = vmul.f32 %v306, 1.442695
        %v322 = vpow.pop %v321
        %v331 = vlaneseq
        %v332 = vand.u32 %v331, 127
        %v333 = vperm.slane %v308, %v332
        %v334 = vperm.slane %v310, %v332
        %v335 = vperm.slane %v312, %v332
        %v336 = vperm.slane %v314, %v332
        %v337 = vperm.slane %v316, %v332
        %v338 = vperm.slane %v318, %v332
        %v339 = vperm.slane %v320, %v332
        %v340 = vperm.slane %v322, %v332
        %vm341 = vcmask 1041409
        %v342 = vsel %vm341, %v334, %v333
        %vm343 = vcmask 1042434
        %v344 = vsel %vm343, %v335, %v342
        %vm345 = vcmask 1043459
        %v346 = vsel %vm345, %v336, %v344
        %vm347 = vcmask 1044484
        %v348 = vsel %vm347, %v337, %v346
        %vm349 = vcmask 1045509
        %v350 = vsel %vm349, %v338, %v348
        %vm351 = vcmask 1046534
        %v352 = vsel %vm351, %v339, %v350
        %vm353 = vcmask 1047559
        %v354 = vsel %vm353, %v340, %v352
        %vm356 = vcmask 64512
        %v357 = vsel %vm356, %v354, 0.0
        %358 = vadd.xlane.f32.xlu0 %v357
        %v359 = vpop.xlane.xlu0 %358
        %v360 = vrcp.pop %v359
        %v362 = vperm.slane %v360, 0
        %v363 = vperm.slane %v360, 1
        %v364 = vperm.slane %v360, 2
        %v365 = vperm.slane %v360, 3
        %v366 = vperm.slane %v360, 4
        %v367 = vperm.slane %v360, 5
        %v368 = vperm.slane %v360, 6
        %v369 = vperm.slane %v360, 7
        %v378 = vmul.f32 %v308, %v362
        %v379 = vmul.f32 %v310, %v363
        %v380 = vmul.f32 %v312, %v364
        %v381 = vmul.f32 %v314, %v365
        %v382 = vmul.f32 %v316, %v366
        %v383 = vmul.f32 %v318, %v367
        %v384 = vmul.f32 %v320, %v368
        %v385 = vmul.f32 %v322, %v369
        %387 = vset.pattern.permute.xlu0 0
        %388 = vperm.xlu0 %387, %v378
        %v389 = vpop.permute.xlu0 %388
        %v390 = vperm.slane %v389, %v332
        %v391 = vsel %vm356, %v390, 0
        %393 = vmatpush.msra.mxu0 0.0
        %394 = vmatpush.msra.mxu0 0.0
        %395 = vmatpush.msra.mxu0 0.0
        %396 = vmatpush.msra.mxu0 0.0
        %397 = vmatpush.msra.mxu0 0.0
        %398 = vmatpush.msra.mxu0 0.0
        %399 = vmatpush.msra.mxu0 0.0
        %400 = vmatpush.msra.mxu0 0.0
        %401 = vmatpush.msra.mxu0 0.0
        %402 = vmatpush.msra.mxu0 0.0
        %403 = vmatpush.msra.mxu0 0.0
        %404 = vmatpush.msra.mxu0 0.0
        %405 = vmatpush.msra.mxu0 0.0
        %406 = vmatpush.msra.mxu0 0.0
        %407 = vmatpush.msra.mxu0 0.0
        %408 = vmatpush.msra.mxu0 %v232
        %409 = vmatmul.f32.gmra.mxu0 %v391
        %v410 = vpop.f32.mrf.mxu0
        %v411 = vadd.f32 0.0, %v410
        %412 = vdwg.mxu0
        %414 = vset.pattern.permute.xlu0 0
        %415 = vperm.xlu0 %414, %v379
        %v416 = vpop.permute.xlu0 %415
        %v417 = vperm.slane %v416, %v332
        %v418 = vsel %vm356, %v417, 0
        %420 = vmatpush.msra.mxu0 0.0
        %421 = vmatpush.msra.mxu0 0.0
        %422 = vmatpush.msra.mxu0 0.0
        %423 = vmatpush.msra.mxu0 0.0
        %424 = vmatpush.msra.mxu0 0.0
        %425 = vmatpush.msra.mxu0 0.0
        %426 = vmatpush.msra.mxu0 0.0
        %427 = vmatpush.msra.mxu0 0.0
        %428 = vmatpush.msra.mxu0 0.0
        %429 = vmatpush.msra.mxu0 0.0
        %430 = vmatpush.msra.mxu0 0.0
        %431 = vmatpush.msra.mxu0 0.0
        %432 = vmatpush.msra.mxu0 0.0
        %433 = vmatpush.msra.mxu0 0.0
        %434 = vmatpush.msra.mxu0 0.0
        %435 = vmatpush.msra.mxu0 %v233
        %436 = vmatmul.f32.gmra.mxu0 %v418
        %v437 = vpop.f32.mrf.mxu0
        %v438 = vadd.f32 0.0, %v437
        %439 = vdwg.mxu0
        %441 = vset.pattern.permute.xlu0 0
        %442 = vperm.xlu0 %441, %v380
        %v443 = vpop.permute.xlu0 %442
        %v444 = vperm.slane %v443, %v332
        %v445 = vsel %vm356, %v444, 0
        %447 = vmatpush.msra.mxu0 0.0
        %448 = vmatpush.msra.mxu0 0.0
        %449 = vmatpush.msra.mxu0 0.0
        %450 = vmatpush.msra.mxu0 0.0
        %451 = vmatpush.msra.mxu0 0.0
        %452 = vmatpush.msra.mxu0 0.0
        %453 = vmatpush.msra.mxu0 0.0
        %454 = vmatpush.msra.mxu0 0.0
        %455 = vmatpush.msra.mxu0 0.0
        %456 = vmatpush.msra.mxu0 0.0
        %457 = vmatpush.msra.mxu0 0.0
        %458 = vmatpush.msra.mxu0 0.0
        %459 = vmatpush.msra.mxu0 0.0
        %460 = vmatpush.msra.mxu0 0.0
        %461 = vmatpush.msra.mxu0 0.0
        %462 = vmatpush.msra.mxu0 %v234
        %463 = vmatmul.f32.gmra.mxu0 %v445
        %v464 = vpop.f32.mrf.mxu0
        %v465 = vadd.f32 0.0, %v464
        %466 = vdwg.mxu0
        %468 = vset.pattern.permute.xlu0 0
        %469 = vperm.xlu0 %468, %v381
        %v470 = vpop.permute.xlu0 %469
        %v471 = vperm.slane %v470, %v332
        %v472 = vsel %vm356, %v471, 0
        %474 = vmatpush.msra.mxu0 0.0
        %475 = vmatpush.msra.mxu0 0.0
        %476 = vmatpush.msra.mxu0 0.0
        %477 = vmatpush.msra.mxu0 0.0
        %478 = vmatpush.msra.mxu0 0.0
        %479 = vmatpush.msra.mxu0 0.0
        %480 = vmatpush.msra.mxu0 0.0
        %481 = vmatpush.msra.mxu0 0.0
        %482 = vmatpush.msra.mxu0 0.0
        %483 = vmatpush.msra.mxu0 0.0
        %484 = vmatpush.msra.mxu0 0.0
        %485 = vmatpush.msra.mxu0 0.0
        %486 = vmatpush.msra.mxu0 0.0
        %487 = vmatpush.msra.mxu0 0.0
        %488 = vmatpush.msra.mxu0 0.0
        %489 = vmatpush.msra.mxu0 %v235
        %490 = vmatmul.f32.gmra.mxu0 %v472
        %v491 = vpop.f32.mrf.mxu0
        %v492 = vadd.f32 0.0, %v491
        %493 = vdwg.mxu0
        %495 = vset.pattern.permute.xlu0 0
        %496 = vperm.xlu0 %495, %v382
        %v497 = vpop.permute.xlu0 %496
        %v498 = vperm.slane %v497, %v332
        %v499 = vsel %vm356, %v498, 0
        %501 = vmatpush.msra.mxu0 0.0
        %502 = vmatpush.msra.mxu0 0.0
        %503 = vmatpush.msra.mxu0 0.0
        %504 = vmatpush.msra.mxu0 0.0
        %505 = vmatpush.msra.mxu0 0.0
        %506 = vmatpush.msra.mxu0 0.0
        %507 = vmatpush.msra.mxu0 0.0
        %508 = vmatpush.msra.mxu0 0.0
        %509 = vmatpush.msra.mxu0 0.0
        %510 = vmatpush.msra.mxu0 0.0
        %511 = vmatpush.msra.mxu0 0.0
        %512 = vmatpush.msra.mxu0 0.0
        %513 = vmatpush.msra.mxu0 0.0
        %514 = vmatpush.msra.mxu0 0.0
        %515 = vmatpush.msra.mxu0 0.0
        %516 = vmatpush.msra.mxu0 %v236
        %517 = vmatmul.f32.gmra.mxu0 %v499
        %v518 = vpop.f32.mrf.mxu0
        %v519 = vadd.f32 0.0, %v518
        %520 = vdwg.mxu0
        %522 = vset.pattern.permute.xlu0 0
        %523 = vperm.xlu0 %522, %v383
        %v524 = vpop.permute.xlu0 %523
        %v525 = vperm.slane %v524, %v332
        %v526 = vsel %vm356, %v525, 0
        %528 = vmatpush.msra.mxu0 0.0
        %529 = vmatpush.msra.mxu0 0.0
        %530 = vmatpush.msra.mxu0 0.0
        %531 = vmatpush.msra.mxu0 0.0
        %532 = vmatpush.msra.mxu0 0.0
        %533 = vmatpush.msra.mxu0 0.0
        %534 = vmatpush.msra.mxu0 0.0
        %535 = vmatpush.msra.mxu0 0.0
        %536 = vmatpush.msra.mxu0 0.0
        %537 = vmatpush.msra.mxu0 0.0
        %538 = vmatpush.msra.mxu0 0.0
        %539 = vmatpush.msra.mxu0 0.0
        %540 = vmatpush.msra.mxu0 0.0
        %541 = vmatpush.msra.mxu0 0.0
        %542 = vmatpush.msra.mxu0 0.0
        %543 = vmatpush.msra.mxu0 %v237
        %544 = vmatmul.f32.gmra.mxu0 %v526
        %v545 = vpop.f32.mrf.mxu0
        %v546 = vadd.f32 0.0, %v545
        %547 = vdwg.mxu0
        %549 = vset.pattern.permute.xlu0 0
        %550 = vperm.xlu0 %549, %v384
        %v551 = vpop.permute.xlu0 %550
        %v552 = vperm.slane %v551, %v332
        %v553 = vsel %vm356, %v552, 0
        %555 = vmatpush.msra.mxu0 0.0
        %556 = vmatpush.msra.mxu0 0.0
        %557 = vmatpush.msra.mxu0 0.0
        %558 = vmatpush.msra.mxu0 0.0
        %559 = vmatpush.msra.mxu0 0.0
        %560 = vmatpush.msra.mxu0 0.0
        %561 = vmatpush.msra.mxu0 0.0
        %562 = vmatpush.msra.mxu0 0.0
        %563 = vmatpush.msra.mxu0 0.0
        %564 = vmatpush.msra.mxu0 0.0
        %565 = vmatpush.msra.mxu0 0.0
        %566 = vmatpush.msra.mxu0 0.0
        %567 = vmatpush.msra.mxu0 0.0
        %568 = vmatpush.msra.mxu0 0.0
        %569 = vmatpush.msra.mxu0 0.0
        %570 = vmatpush.msra.mxu0 %v238
        %571 = vmatmul.f32.gmra.mxu0 %v553
        %v572 = vpop.f32.mrf.mxu0
        %v573 = vadd.f32 0.0, %v572
        %574 = vdwg.mxu0
        %576 = vset.pattern.permute.xlu0 0
        %577 = vperm.xlu0 %576, %v385
        %v578 = vpop.permute.xlu0 %577
        %v579 = vperm.slane %v578, %v332
        %v580 = vsel %vm356, %v579, 0
        %582 = vmatpush.msra.mxu0 0.0
        %583 = vmatpush.msra.mxu0 0.0
        %584 = vmatpush.msra.mxu0 0.0
        %585 = vmatpush.msra.mxu0 0.0
        %586 = vmatpush.msra.mxu0 0.0
        %587 = vmatpush.msra.mxu0 0.0
        %588 = vmatpush.msra.mxu0 0.0
        %589 = vmatpush.msra.mxu0 0.0
        %590 = vmatpush.msra.mxu0 0.0
        %591 = vmatpush.msra.mxu0 0.0
        %592 = vmatpush.msra.mxu0 0.0
        %593 = vmatpush.msra.mxu0 0.0
        %594 = vmatpush.msra.mxu0 0.0
        %595 = vmatpush.msra.mxu0 0.0
        %596 = vmatpush.msra.mxu0 0.0
        %597 = vmatpush.msra.mxu0 %v239
        %598 = vmatmul.f32.gmra.mxu0 %v580
        %v599 = vpop.f32.mrf.mxu0
        %v600 = vadd.f32 0.0, %v599
        %601 = vdwg.mxu0
        %v610 = vrot.slane %v438, 7
        %v611 = vsel %vm341, %v610, %v411
        %v612 = vrot.slane %v465, 6
        %v613 = vsel %vm343, %v612, %v611
        %v614 = vrot.slane %v492, 5
        %v615 = vsel %vm345, %v614, %v613
        %v616 = vrot.slane %v519, 4
        %v617 = vsel %vm347, %v616, %v615
        %v618 = vrot.slane %v546, 3
        %v619 = vsel %vm349, %v618, %v617
        %v620 = vrot.slane %v573, 2
        %v621 = vsel %vm351, %v620, %v619
        %v622 = vrot.slane %v600, 1
        %v623 = vsel %vm353, %v622, %v621
        %625 = vst [vmem:[%s230] sm:$0xff] %v623
        %s626 = sand.u32 %s105, 1
        %s627 = scalar_lea.sflag [#allocation5], %s626
        %s628 = sand.u32 %s105, 1
        %s629 = smul.addr %s628, 8
        %s630 = scalar_lea.vmem [#allocation8], %s629
        // Predicated region
        $region41: #{tpu_custom_call.1} parent=31 // pred_check
          %p631 = pneg %p115
        $region42: #{tpu_custom_call.1} parent=31 // pred_check_branch
          %633 = sbr.rel (%p631) target = $region44
        $region43: #{tpu_custom_call.1} parent=31 // pred_region
          %635 = vsyncadd %s627, 0
          %s636 = smul.addr %s24, 8
          %s637 = scalar_lea.hbm %s3, %s636
          %s639 = sshll.u32 %s630, 4
          %s640 = int_to_ptr.vmem [resolvable:$true] %s639
          %s641 = sshll.u32 %s637, 4
          %s642 = int_to_ptr.hbm [resolvable:$true] %s641
          %644 = dma.vmem_to_hbm [thread:$0]  %s640, 128, %s642, %s627
        $region44: #{tpu_custom_call.1} parent=31 // pred_fallthru
          _
      $region32: #{tpu_custom_call.1} parent=5 // pred_fallthru
        _
      %p645 = scmp.le.s32.totalorder 2, %s19
      // Predicated region
      $region45: #{tpu_custom_call.1} parent=5 // pred_check
        %p646 = pneg %p645
      $region46: #{tpu_custom_call.1} parent=5 // pred_check_branch
        %648 = sbr.rel (%p646) target = $region48
      $region47: #{tpu_custom_call.1} parent=5 // pred_region
        %s649 = ssub.s32 %s19, 2
        // Predicated region
        $region49: #{tpu_custom_call.1} parent=47 // pred_check
          %p650 = pneg %p121
        $region50: #{tpu_custom_call.1} parent=47 // pred_check_branch
          %652 = sbr.rel (%p650) target = $region52
        $region51: #{tpu_custom_call.1} parent=47 // pred_region
          %s653 = sand.u32 %s106, 1
          %s654 = scalar_lea.sflag [#allocation5], %s653
          %s655 = sand.u32 %s106, 1
          %s656 = smul.addr %s655, 8
          %s657 = scalar_lea.vmem [#allocation8], %s656
          %659 = dma.done %s654, 128
        $region52: #{tpu_custom_call.1} parent=47 // pred_fallthru
          _
      $region48: #{tpu_custom_call.1} parent=5 // pred_fallthru
        _
    $region6: #{tpu_custom_call.1} parent=1 // loop_footer
      %s23 = sadd.s32 1, %s19
    $region7: #{tpu_custom_call.1} parent=1 // loop_footer_branch
      %18 = sbr.rel target = $region3
    $region8: #{tpu_custom_call.1} parent=1 // loop_exit
      _
    %660 = vsyncpa [#allocation4], 1
    %s661 = scalar_lea.sflag [#allocation4], 1
    %662 = vsyncpa %s661, 1
    %663 = vsyncpa [#allocation7], 1
    %s664 = scalar_lea.sflag [#allocation7], 1
    %665 = vsyncpa %s664, 1
    %666 = vsyncpa [#allocation5], 1
    %s667 = scalar_lea.sflag [#allocation5], 1
    %668 = vsyncpa %s667, 1

</llo_original>
